<compile_context>
chip_gen: v5e
topology: v5e:2x2
jax: 0.10.0
libtpu: 0.0.40
codegen_flags: <defaults>
</compile_context>

<pallas_src>
import functools

import jax
import jax.numpy as jnp
from jax import lax
from jax.experimental import pallas as pl
from jax.experimental.pallas import tpu as pltpu


def _round_up(x, m):
    return ((x + m - 1) // m) * m


def _cdiv(a, b):
    return -(-a // b)


def _focal_body(x, t, pw, out_ref, *, gamma, gamma_int, tile_b, total_rows,
                needs_mask):
    """Elementwise focal-loss chain on an f32 (tile_b, L) tile; writes an
    (8, L) sublane-aligned partial sum to out_ref."""
    # Numerically-stable softplus pieces sharing a single exp(-|x|):
    #   softplus(-x) = max(-x, 0) + log1p(exp(-|x|))
    #   softplus( x) = max( x, 0) + log1p(exp(-|x|))
    abs_x = jnp.abs(x)
    e = jnp.exp(-abs_x)                          # EUP #1
    log1p_e = jnp.log1p(e)                       # EUP #2
    softplus_neg_x = jnp.maximum(-x, 0.0) + log1p_e
    softplus_pos_x = jnp.maximum(x, 0.0) + log1p_e

    # BCE-with-logits (reduction='none', with optional pos_weight):
    #   loss = pos_weight * t * softplus(-x) + (1 - t) * softplus(x)
    if pw is None:
        bce = t * softplus_neg_x + (1.0 - t) * softplus_pos_x
    else:
        bce = (t * pw) * softplus_neg_x + (1.0 - t) * softplus_pos_x

    # Sigmoid reusing e = exp(-|x|):
    #   sigma(x) = 1/(1+e) if x >= 0 else 1 - 1/(1+e)
    d = 1.0 + e
    r = pl.reciprocal(d, approx=True)            # EUP #3 (single vrcp push)
    inv = r * (2.0 - d * r)                      # one Newton step -> f32 accuracy
    probs = jnp.where(x >= 0.0, inv, 1.0 - inv)

    # 1 - pt = probs + t - 2*probs*t   (clamp dodges pow-of-negative NaN)
    w = jnp.maximum(probs + t - 2.0 * (probs * t), 0.0)

    if gamma_int is not None:
        if gamma_int == 0:
            loss = bce
        else:
            focal = w
            for _ in range(gamma_int - 1):       # integer gamma: pure VPU muls
                focal = focal * w
            loss = focal * bce
    else:
        loss = (w ** gamma) * bce                # float gamma: falls back to pow

    L = loss.shape[-1]

    def _write(vals):
        # (tile_b, L) -> (tile_b//8, 8, L) -> sum axis 0: sublane-aligned
        # whole-vreg adds (VPU only, no XLU full reduce), lane-dense output.
        out_ref[...] = jnp.sum(vals.reshape(tile_b // 8, 8, L), axis=0)

    if needs_mask:
        i = pl.program_id(0)
        is_tail = i == pl.num_programs(0) - 1

        @pl.when(jnp.logical_not(is_tail))
        def _():
            _write(loss)

        @pl.when(is_tail)
        def _():
            # Cold path: only the final partial block pays for the mask.
            remaining = total_rows - i * tile_b
            row_ids = lax.broadcasted_iota(jnp.int32, loss.shape, 0)
            _write(jnp.where(row_ids < remaining, loss, 0.0))
    else:
        _write(loss)


def _focal_kernel_pw(logits_ref, targets_ref, pw_ref, out_ref, **kw):
    _focal_body(logits_ref[...].astype(jnp.float32),
                targets_ref[...].astype(jnp.float32),
                pw_ref[...].astype(jnp.float32),
                out_ref, **kw)


def _focal_kernel_nopw(logits_ref, targets_ref, out_ref, **kw):
    _focal_body(logits_ref[...].astype(jnp.float32),
                targets_ref[...].astype(jnp.float32),
                None,
                out_ref, **kw)


def focal_loss(logits, targets, pos_weight=None, gamma=2.0, reduction="mean",
               block_bytes=4 << 20):
    """Pallas TPU FocalLoss forward.

    logits, targets: [B, L] arrays (any float/int dtype; upcast to f32
    in-kernel, so narrow inputs such as bf16 cut HBM traffic for free).
    pos_weight: None or [L] array (per-label weight, broadcast over batch).
    reduction: 'mean' or 'sum'.
    """
    if reduction not in ("mean", "sum"):
        # TODO(synk): reduction='none' (per-element loss output) not implemented in-kernel.
        raise NotImplementedError("only 'mean' and 'sum' reductions are implemented")

    B, L = logits.shape

    # Batch tile: ~block_bytes of f32 per input block, multiple of 8 sublanes,
    # but capped so the grid has >= 4 blocks when B allows it (keeps both
    # TensorCores busy on v7x via the "parallel" grid axis).
    budget_rows = max(8, (block_bytes // (L * 4)) // 8 * 8)
    quarter_rows = _round_up(_cdiv(B, 4), 8)
    tile_b = max(8, min(budget_rows, quarter_rows))

    num_blocks = _cdiv(B, tile_b)
    needs_mask = (num_blocks * tile_b) != B

    g = float(gamma)
    gamma_int = int(g) if (g.is_integer() and 0 <= g <= 8) else None

    common = dict(gamma=g, gamma_int=gamma_int, tile_b=tile_b,
                  total_rows=B, needs_mask=needs_mask)

    in_specs = [
        pl.BlockSpec((tile_b, L), lambda i: (i, 0)),   # logits tile
        pl.BlockSpec((tile_b, L), lambda i: (i, 0)),   # targets tile
    ]
    args = [logits, targets]

    if pos_weight is None:
        kernel = functools.partial(_focal_kernel_nopw, **common)
    else:
        pw = jnp.asarray(pos_weight, jnp.float32).reshape(1, L)
        in_specs.append(pl.BlockSpec((1, L), lambda i: (0, 0)))  # resident
        args.append(pw)
        kernel = functools.partial(_focal_kernel_pw, **common)

    # Pipeline footprint: 2 input streams x 2 buffers x one block (+ headroom
    # for elementwise temporaries / output buffers).  Cap below v7x physical.
    in_block_bytes = tile_b * L * (jnp.dtype(logits.dtype).itemsize +
                                   jnp.dtype(targets.dtype).itemsize)
    vmem_limit = int(min(max(32 << 20, 2 * in_block_bytes + (8 << 20)),
                         60 << 20))

    partials = pl.pallas_call(
        kernel,
        out_shape=jax.ShapeDtypeStruct((num_blocks * 8, L), jnp.float32),
        grid_spec=pltpu.PrefetchScalarGridSpec(
            num_scalar_prefetch=0,
            grid=(num_blocks,),
            in_specs=in_specs,
            out_specs=pl.BlockSpec((8, L), lambda i: (i, 0)),  # per-block partials
        ),
        compiler_params=pltpu.CompilerParams(
            dimension_semantics=("parallel",),               # megacore-friendly
            vmem_limit_bytes=vmem_limit),
    )(*args)

    total = jnp.sum(partials)
    if reduction == "mean":
        return total / float(B * L)
    return total


def focal_loss_ref(logits, targets, pos_weight=None, gamma=2.0, reduction="mean"):
    """Pure-JAX reference mirroring the PyTorch module."""
    x = logits.astype(jnp.float32)
    t = targets.astype(jnp.float32)
    pw = jnp.ones_like(x) if pos_weight is None else jnp.asarray(
        pos_weight, jnp.float32)
    bce = pw * t * jax.nn.softplus(-x) + (1.0 - t) * jax.nn.softplus(x)
    p = jax.nn.sigmoid(x)
    pt = p * t + (1.0 - p) * (1.0 - t)
    loss = ((1.0 - pt) ** gamma) * bce
    if reduction == "mean":
        return jnp.mean(loss)
    return jnp.sum(loss)


if __name__ == "__main__":
    key = jax.random.PRNGKey(0)
    k1, k2, k3 = jax.random.split(key, 3)

    # (batch, num_labels) — multi-label classification head of the BEHRT model.
    B, L = 16, 128
    logits = jax.random.normal(k1, (B, L), jnp.float32) * 2.0
    targets = (jax.random.uniform(k2, (B, L)) > 0.7).astype(jnp.float32)
    pos_weight = 1.0 + jax.random.uniform(k3, (L,), jnp.float32)

    out = focal_loss(logits, targets, pos_weight=pos_weight, gamma=2.0)
    out = jax.block_until_ready(out)
    ref = focal_loss_ref(logits, targets, pos_weight=pos_weight, gamma=2.0)
    assert jnp.allclose(out, ref, rtol=1e-5, atol=1e-6), (out, ref)

    # Ragged batch (exercises cdiv grid + cold-path tail mask), no pos_weight.
    B2 = 19
    logits2 = jax.random.normal(k1, (B2, L), jnp.float32) * 3.0
    targets2 = (jax.random.uniform(k2, (B2, L)) > 0.5).astype(jnp.float32)
    out2 = jax.block_until_ready(focal_loss(logits2, targets2, gamma=2.0))
    ref2 = focal_loss_ref(logits2, targets2, gamma=2.0)
    assert jnp.allclose(out2, ref2, rtol=1e-5, atol=1e-6), (out2, ref2)

    # Narrow-dtype targets (bf16 0/1 is exact): same math, 25% fewer input bytes.
    targets3 = targets.astype(jnp.bfloat16)
    out3 = jax.block_until_ready(
        focal_loss(logits, targets3, pos_weight=pos_weight, gamma=2.0))
    assert jnp.allclose(out3, ref, rtol=1e-5, atol=1e-6), (out3, ref)

    # 'sum' reduction path.
    out4 = jax.block_until_ready(
        focal_loss(logits, targets, pos_weight=pos_weight, gamma=2.0,
                   reduction="sum"))
    ref4 = focal_loss_ref(logits, targets, pos_weight=pos_weight, gamma=2.0,
                          reduction="sum")
    assert jnp.allclose(out4, ref4, rtol=1e-5, atol=1e-5), (out4, ref4)

    print("KERNEL_OK")
</pallas_src>

<mosaic_0001>
module attributes {stable_mosaic.version = 11 : i64} {
  func.func @_focal_kernel_pw(%arg0: i32, %arg1: memref<8x128xf32, #tpu.memory_space<vmem>>, %arg2: memref<8x128xf32, #tpu.memory_space<vmem>>, %arg3: memref<1x128xf32, #tpu.memory_space<vmem>>, %arg4: memref<8x128xf32, #tpu.memory_space<vmem>>) attributes {dimension_semantics = [#tpu.dimension_semantics<parallel>], iteration_bounds = array<i64: 2>, scalar_prefetch = 0 : i64, scratch_operands = 0 : i64, tpu.core_type = #tpu.core_type<tc>, window_params = [{transform_indices = @transform_0, window_bounds = array<i64: 8, 128>}, {transform_indices = @transform_1, window_bounds = array<i64: 8, 128>}, {pipeline_mode = #tpu.pipeline_mode<synchronous>, transform_indices = @transform_2, window_bounds = array<i64: 1, 128>}, {transform_indices = @transform_3, window_bounds = array<i64: 8, 128>}]} {
    %c0 = arith.constant 0 : index
    %c0_0 = arith.constant 0 : index
    %0 = vector.load %arg1[%c0, %c0_0] : memref<8x128xf32, #tpu.memory_space<vmem>>, vector<8x128xf32>
    %c0_1 = arith.constant 0 : index
    %c0_2 = arith.constant 0 : index
    %1 = vector.load %arg2[%c0_1, %c0_2] : memref<8x128xf32, #tpu.memory_space<vmem>>, vector<8x128xf32>
    %c0_3 = arith.constant 0 : index
    %c0_4 = arith.constant 0 : index
    %2 = vector.load %arg3[%c0_3, %c0_4] : memref<1x128xf32, #tpu.memory_space<vmem>>, vector<1x128xf32>
    %3 = math.absf %0 : vector<8x128xf32>
    %cst = arith.constant 0.000000e+00 : f32
    %4 = vector.broadcast %cst : f32 to vector<8x128xf32>
    %5 = arith.subf %4, %3 : vector<8x128xf32>
    %6 = math.exp %5 : vector<8x128xf32>
    %7 = math.log1p %6 : vector<8x128xf32>
    %cst_5 = arith.constant 0.000000e+00 : f32
    %8 = vector.broadcast %cst_5 : f32 to vector<8x128xf32>
    %9 = arith.subf %8, %0 : vector<8x128xf32>
    %cst_6 = arith.constant 0.000000e+00 : f32
    %10 = vector.broadcast %cst_6 : f32 to vector<8x128xf32>
    %11 = arith.maximumf %9, %10 : vector<8x128xf32>
    %12 = arith.addf %11, %7 : vector<8x128xf32>
    %cst_7 = arith.constant 0.000000e+00 : f32
    %13 = vector.broadcast %cst_7 : f32 to vector<8x128xf32>
    %14 = arith.maximumf %0, %13 : vector<8x128xf32>
    %15 = arith.addf %14, %7 : vector<8x128xf32>
    %16 = vector.broadcast %2 : vector<1x128xf32> to vector<8x128xf32>
    %17 = arith.mulf %1, %16 : vector<8x128xf32>
    %18 = arith.mulf %17, %12 : vector<8x128xf32>
    %cst_8 = arith.constant 1.000000e+00 : f32
    %19 = vector.broadcast %cst_8 : f32 to vector<8x128xf32>
    %20 = arith.subf %19, %1 : vector<8x128xf32>
    %21 = arith.mulf %20, %15 : vector<8x128xf32>
    %22 = arith.addf %18, %21 : vector<8x128xf32>
    %cst_9 = arith.constant 1.000000e+00 : f32
    %23 = vector.broadcast %cst_9 : f32 to vector<8x128xf32>
    %24 = arith.addf %23, %6 : vector<8x128xf32>
    %25 = tpu.reciprocal %24 {approx = true} : vector<8x128xf32> -> vector<8x128xf32>
    %26 = arith.mulf %24, %25 : vector<8x128xf32>
    %cst_10 = arith.constant 2.000000e+00 : f32
    %27 = vector.broadcast %cst_10 : f32 to vector<8x128xf32>
    %28 = arith.subf %27, %26 : vector<8x128xf32>
    %29 = arith.mulf %25, %28 : vector<8x128xf32>
    %cst_11 = arith.constant 0.000000e+00 : f32
    %30 = vector.broadcast %cst_11 : f32 to vector<8x128xf32>
    %31 = arith.cmpf oge, %0, %30 : vector<8x128xf32>
    %cst_12 = arith.constant 1.000000e+00 : f32
    %32 = vector.broadcast %cst_12 : f32 to vector<8x128xf32>
    %33 = arith.subf %32, %29 : vector<8x128xf32>
    %34 = arith.select %31, %29, %33 : vector<8x128xi1>, vector<8x128xf32>
    %35 = arith.addf %34, %1 : vector<8x128xf32>
    %36 = arith.mulf %34, %1 : vector<8x128xf32>
    %cst_13 = arith.constant 2.000000e+00 : f32
    %37 = vector.broadcast %cst_13 : f32 to vector<8x128xf32>
    %38 = arith.mulf %37, %36 : vector<8x128xf32>
    %39 = arith.subf %35, %38 : vector<8x128xf32>
    %cst_14 = arith.constant 0.000000e+00 : f32
    %40 = vector.broadcast %cst_14 : f32 to vector<8x128xf32>
    %41 = arith.maximumf %39, %40 : vector<8x128xf32>
    %42 = arith.mulf %41, %41 : vector<8x128xf32>
    %43 = arith.mulf %42, %22 : vector<8x128xf32>
    %44 = vector.shape_cast %43 : vector<8x128xf32> to vector<1x8x128xf32>
    %cst_15 = arith.constant dense<0.000000e+00> : vector<8x128xf32>
    %45 = vector.multi_reduction <add>, %44, %cst_15 [0] : vector<1x8x128xf32> to vector<8x128xf32>
    %c0_16 = arith.constant 0 : index
    %c0_17 = arith.constant 0 : index
    %46 = vector.load %arg4[%c0_16, %c0_17] : memref<8x128xf32, #tpu.memory_space<vmem>>, vector<8x128xf32>
    tpu.vector_store %arg4[%c0_16, %c0_17], %45 {strides = array<i32>} : memref<8x128xf32, #tpu.memory_space<vmem>>, vector<8x128xf32>,
    return
  }
  func.func @transform_0(%arg0: i32) -> (i32, i32) {
    %c0_i32 = arith.constant 0 : i32
    %c0_i32_0 = arith.constant 0 : i32
    return %arg0, %c0_i32 : i32, i32
  }
  func.func @transform_1(%arg0: i32) -> (i32, i32) {
    %c0_i32 = arith.constant 0 : i32
    %c0_i32_0 = arith.constant 0 : i32
    return %arg0, %c0_i32 : i32, i32
  }
  func.func @transform_2(%arg0: i32) -> (i32, i32) {
    %c0_i32 = arith.constant 0 : i32
    %c0_i32_0 = arith.constant 0 : i32
    %c0_i32_1 = arith.constant 0 : i32
    return %c0_i32, %c0_i32_0 : i32, i32
  }
  func.func @transform_3(%arg0: i32) -> (i32, i32) {
    %c0_i32 = arith.constant 0 : i32
    %c0_i32_0 = arith.constant 0 : i32
    return %arg0, %c0_i32 : i32, i32
  }
}

</mosaic_0001>

<llo_original>
// kernel: tpu_custom_call.1
$region0: #{tpu_custom_call.1}
  #allocation0 [shape = 'u32[]', space=smem, size = 0x4, offset = 0x4, fixed_abs, tag = 'smem constant byte address 0x4 - core index']
  #allocation1 [shape = 'u32[72,128]{1,0:T(1,128)}', space=vmem, size = 0x9000, scoped, tag = 'internal scratch']
  %s0 = inlined_call_operand.hbm [shape: f32[16,128], index: 0, kind: input, shape index: {}]
  %s1 = inlined_call_operand.hbm [shape: f32[16,128], index: 1, kind: input, shape index: {}]
  %s2 = inlined_call_operand.vmem [shape: f32[1,128], index: 2, kind: input, shape index: {}]
  %s3 = inlined_call_operand.hbm [shape: f32[16,128], index: 3, kind: output, shape index: {}]
  %s4 = sld [smem:[#allocation0]]
  $region53: #{tpu_custom_call.1} parent=0
    _
  %s6 = ssub.s32 1, %s4
  %s7 = scalar_select 0, %s6, %s4
  $region1: #{tpu_custom_call.1} parent=0
    #allocation2 [shape = 'u8[8192]{0}', space=vmem, size = 0x2000, scoped, tag = 'input window, operand 0']
    #allocation3 [shape = 's32[2]{0}', space=sflag, size = 0x8, scoped, tag = 'scoped memory for tpu_custom_call.1']
    #allocation4 [shape = 's32[2]{0}', space=sflag, size = 0x8, scoped, tag = 'scoped memory for tpu_custom_call.1']
    #allocation5 [shape = 'u8[8192]{0}', space=vmem, size = 0x2000, scoped, tag = 'input window, operand 1']
    #allocation6 [shape = 's32[2]{0}', space=sflag, size = 0x8, scoped, tag = 'scoped memory for tpu_custom_call.1']
    #allocation7 [shape = 'u8[8192]{0}', space=vmem, size = 0x2000, scoped, tag = 'output window, operand 0']
    %8 = vsyncpa [#allocation3], 0
    %s9 = scalar_lea.sflag [#allocation3], 1
    %10 = vsyncpa %s9, 0
    %11 = vsyncpa [#allocation6], 0
    %s12 = scalar_lea.sflag [#allocation6], 1
    %13 = vsyncpa %s12, 0
    %14 = vsyncpa [#allocation4], 0
    %s15 = scalar_lea.sflag [#allocation4], 1
    %16 = vsyncpa %s15, 0
    loop: start=0, step=1, limit=4
    $region2: #{tpu_custom_call.1} parent=1 // loop_pre_header
      _
    $region3: #{tpu_custom_call.1} parent=1 // loop_header
      %s18 = sphi 0, %s22
      %p19 = scmp.ge.s32.totalorder %s18, 4
      %s28 = sphi 0, %s30
      %s31 = sphi 0, %s28
      %s32 = sphi 0, %s31
      %s48 = sphi 0, %s32
      %s54 = sphi 0, %s56
      %s57 = sphi 0, %s54
      %s58 = sphi 0, %s57
      %s74 = sphi 0, %s58
      %s78 = sphi 0, %s78
      %s80 = sphi 0, %s78
      %s81 = sphi 0, %s80
      %s95 = sphi 0, %s81
      %s101 = sphi 0, %s103
      %s104 = sphi 0, %s101
      %s105 = sphi 0, %s104
      %s121 = sphi 0, %s105
    $region4: #{tpu_custom_call.1} parent=1 // loop_header_branch
      %21 = sbr.rel (%p19) target = $region8
    $region5: #{tpu_custom_call.1} parent=1 // loop_body
      %s23 = ssub.s32 %s18, 1
      %s24 = ssub.s32 %s18, 2
      %s25 = sadd.s32 %s18, 1
      %s26 = ssub.s32 %s18, %s25
      %p27 = scmp.eq.s32.totalorder %s26, 0
      %s29 = sadd.s32 %s28, 1
      %s30 = scalar_select %p27, %s28, %s29
      %p33 = pneg %p27
      %p34 = scmp.eq.s32.totalorder %s18, 1
      %p35 = por %p33, %p34
      %p36 = scmp.ne.s32.totalorder %s28, %s31
      %p37 = scmp.eq.s32.totalorder %s18, 0
      %p38 = por %p36, %p37
      %p39 = scmp.ne.s32.totalorder %s28, %s31
      %p40 = scmp.eq.s32.totalorder %s23, 1
      %p41 = por %p39, %p40
      %p42 = scmp.ne.s32.totalorder %s31, %s32
      %p43 = scmp.eq.s32.totalorder %s23, 0
      %p44 = por %p42, %p43
      %p45 = scmp.ne.s32.totalorder %s31, %s32
      %p46 = scmp.eq.s32.totalorder %s24, 1
      %p47 = por %p45, %p46
      %p49 = scmp.ne.s32.totalorder %s32, %s48
      %p50 = scmp.eq.s32.totalorder %s24, 0
      %p51 = por %p49, %p50
      %s52 = ssub.s32 %s18, %s25
      %p53 = scmp.eq.s32.totalorder %s52, 0
      %s55 = sadd.s32 %s54, 1
      %s56 = scalar_select %p53, %s54, %s55
      %p59 = pneg %p53
      %p60 = scmp.eq.s32.totalorder %s18, 1
      %p61 = por %p59, %p60
      %p62 = scmp.ne.s32.totalorder %s54, %s57
      %p63 = scmp.eq.s32.totalorder %s18, 0
      %p64 = por %p62, %p63
      %p65 = scmp.ne.s32.totalorder %s54, %s57
      %p66 = scmp.eq.s32.totalorder %s23, 1
      %p67 = por %p65, %p66
      %p68 = scmp.ne.s32.totalorder %s57, %s58
      %p69 = scmp.eq.s32.totalorder %s23, 0
      %p70 = por %p68, %p69
      %p71 = scmp.ne.s32.totalorder %s57, %s58
      %p72 = scmp.eq.s32.totalorder %s24, 1
      %p73 = por %p71, %p72
      %p75 = scmp.ne.s32.totalorder %s58, %s74
      %p76 = scmp.eq.s32.totalorder %s24, 0
      %p77 = por %p75, %p76
      %s79 = sadd.s32 %s78, 1
      %p82 = scmp.eq.s32.totalorder %s18, 1
      %p83 = scmp.ne.s32.totalorder %s78, %s80
      %p84 = scmp.eq.s32.totalorder %s18, 0
      %p85 = por %p83, %p84
      %p86 = scmp.ne.s32.totalorder %s78, %s80
      %p87 = scmp.eq.s32.totalorder %s23, 1
      %p88 = por %p86, %p87
      %p89 = scmp.ne.s32.totalorder %s80, %s81
      %p90 = scmp.eq.s32.totalorder %s23, 0
      %p91 = por %p89, %p90
      %p92 = scmp.ne.s32.totalorder %s80, %s81
      %p93 = scmp.eq.s32.totalorder %s24, 1
      %p94 = por %p92, %p93
      %p96 = scmp.ne.s32.totalorder %s81, %s95
      %p97 = scmp.eq.s32.totalorder %s24, 0
      %p98 = por %p96, %p97
      %s99 = ssub.s32 %s18, %s25
      %p100 = scmp.eq.s32.totalorder %s99, 0
      %s102 = sadd.s32 %s101, 1
      %s103 = scalar_select %p100, %s101, %s102
      %p106 = pneg %p100
      %p107 = scmp.eq.s32.totalorder %s18, 1
      %p108 = por %p106, %p107
      %p109 = scmp.ne.s32.totalorder %s101, %s104
      %p110 = scmp.eq.s32.totalorder %s18, 0
      %p111 = por %p109, %p110
      %p112 = scmp.ne.s32.totalorder %s101, %s104
      %p113 = scmp.eq.s32.totalorder %s23, 1
      %p114 = por %p112, %p113
      %p115 = scmp.ne.s32.totalorder %s104, %s105
      %p116 = scmp.eq.s32.totalorder %s23, 0
      %p117 = por %p115, %p116
      %p118 = scmp.ne.s32.totalorder %s104, %s105
      %p119 = scmp.eq.s32.totalorder %s24, 1
      %p120 = por %p118, %p119
      %p122 = scmp.ne.s32.totalorder %s105, %s121
      %p123 = scmp.eq.s32.totalorder %s24, 0
      %p124 = por %p122, %p123
      %p125 = scmp.le.s32.totalorder 1, %s18
      %p126 = scmp.lt.s32.totalorder %s18, 3
      %p127 = pnand %p125, %p126
      %p128 = pneg %p127
      // Predicated region
      $region9: #{tpu_custom_call.1} parent=5 // pred_check
        _
      $region10: #{tpu_custom_call.1} parent=5 // pred_check_branch
        %130 = sbr.rel (%p127) target = $region12
      $region11: #{tpu_custom_call.1} parent=5 // pred_region
        %s131 = ssub.s32 %s18, 1
        // Predicated region
        $region13: #{tpu_custom_call.1} parent=11 // pred_check
          %p132 = pneg %p91
        $region14: #{tpu_custom_call.1} parent=11 // pred_check_branch
          %134 = sbr.rel (%p132) target = $region16
        $region15: #{tpu_custom_call.1} parent=11 // pred_region
          _
        $region16: #{tpu_custom_call.1} parent=11 // pred_fallthru
          _
      $region12: #{tpu_custom_call.1} parent=5 // pred_fallthru
        _
      %p135 = scmp.lt.s32.totalorder %s18, 2
      // Predicated region
      $region17: #{tpu_custom_call.1} parent=5 // pred_check
        %p136 = pneg %p135
      $region18: #{tpu_custom_call.1} parent=5 // pred_check_branch
        %138 = sbr.rel (%p136) target = $region20
      $region19: #{tpu_custom_call.1} parent=5 // pred_region
        // Predicated region
        $region21: #{tpu_custom_call.1} parent=19 // pred_check
          %p139 = pneg %p38
        $region22: #{tpu_custom_call.1} parent=19 // pred_check_branch
          %141 = sbr.rel (%p139) target = $region24
        $region23: #{tpu_custom_call.1} parent=19 // pred_region
          %s142 = sand.u32 %s28, 1
          %s143 = scalar_lea.sflag [#allocation3], %s142
          %s144 = sand.u32 %s28, 1
          %s145 = smul.addr %s144, 8
          %s146 = scalar_lea.vmem [#allocation2], %s145
          %148 = vsyncadd %s143, 0
          %s149 = smul.addr %s18, 8
          %s150 = scalar_lea.hbm %s0, %s149
          %s152 = sshll.u32 %s150, 4
          %s153 = int_to_ptr.hbm [resolvable:$true] %s152
          %s154 = sshll.u32 %s146, 4
          %s155 = int_to_ptr.vmem [resolvable:$true] %s154
          %157 = dma.hbm_to_vmem [thread:$0]  %s153, 128, %s155, %s143
        $region24: #{tpu_custom_call.1} parent=19 // pred_fallthru
          _
        // Predicated region
        $region25: #{tpu_custom_call.1} parent=19 // pred_check
          %p158 = pneg %p64
        $region26: #{tpu_custom_call.1} parent=19 // pred_check_branch
          %160 = sbr.rel (%p158) target = $region28
        $region27: #{tpu_custom_call.1} parent=19 // pred_region
          %s161 = sand.u32 %s54, 1
          %s162 = scalar_lea.sflag [#allocation6], %s161
          %s163 = sand.u32 %s54, 1
          %s164 = smul.addr %s163, 8
          %s165 = scalar_lea.vmem [#allocation5], %s164
          %167 = vsyncadd %s162, 0
          %s168 = smul.addr %s18, 8
          %s169 = scalar_lea.hbm %s1, %s168
          %s171 = sshll.u32 %s169, 4
          %s172 = int_to_ptr.hbm [resolvable:$true] %s171
          %s173 = sshll.u32 %s165, 4
          %s174 = int_to_ptr.vmem [resolvable:$true] %s173
          %176 = dma.hbm_to_vmem [thread:$0]  %s172, 128, %s174, %s162
        $region28: #{tpu_custom_call.1} parent=19 // pred_fallthru
          _
      $region20: #{tpu_custom_call.1} parent=5 // pred_fallthru
        _
      %p177 = scmp.le.s32.totalorder 1, %s18
      %p178 = scmp.lt.s32.totalorder %s18, 3
      %p179 = pnand %p177, %p178
      %p180 = pneg %p179
      // Predicated region
      $region29: #{tpu_custom_call.1} parent=5 // pred_check
        _
      $region30: #{tpu_custom_call.1} parent=5 // pred_check_branch
        %182 = sbr.rel (%p179) target = $region32
      $region31: #{tpu_custom_call.1} parent=5 // pred_region
        %s183 = ssub.s32 %s18, 1
        %s184 = sand.u32 %s31, 1
        %s185 = scalar_lea.sflag [#allocation3], %s184
        %s186 = sand.u32 %s31, 1
        %s187 = smul.addr %s186, 8
        %s188 = scalar_lea.vmem [#allocation2], %s187
        // Predicated region
        $region33: #{tpu_custom_call.1} parent=31 // pred_check
          %p189 = pneg %p44
        $region34: #{tpu_custom_call.1} parent=31 // pred_check_branch
          %191 = sbr.rel (%p189) target = $region36
        $region35: #{tpu_custom_call.1} parent=31 // pred_region
          %193 = dma.done %s185, 128
        $region36: #{tpu_custom_call.1} parent=31 // pred_fallthru
          _
        %s194 = sand.u32 %s57, 1
        %s195 = scalar_lea.sflag [#allocation6], %s194
        %s196 = sand.u32 %s57, 1
        %s197 = smul.addr %s196, 8
        %s198 = scalar_lea.vmem [#allocation5], %s197
        // Predicated region
        $region37: #{tpu_custom_call.1} parent=31 // pred_check
          %p199 = pneg %p70
        $region38: #{tpu_custom_call.1} parent=31 // pred_check_branch
          %201 = sbr.rel (%p199) target = $region40
        $region39: #{tpu_custom_call.1} parent=31 // pred_region
          %203 = dma.done %s195, 128
        $region40: #{tpu_custom_call.1} parent=31 // pred_fallthru
          _
        %s204 = sand.u32 %s31, 1
        %s205 = scalar_lea.sflag [#allocation3], %s204
        %s206 = sand.u32 %s31, 1
        %s207 = smul.addr %s206, 8
        %s208 = scalar_lea.vmem [#allocation2], %s207
        %p209 = pneg %p44
        %p210 = pneg %p41
        %s211 = sand.u32 %s57, 1
        %s212 = scalar_lea.sflag [#allocation6], %s211
        %s213 = sand.u32 %s57, 1
        %s214 = smul.addr %s213, 8
        %s215 = scalar_lea.vmem [#allocation5], %s214
        %p216 = pneg %p70
        %p217 = pneg %p67
        %p218 = pneg %p91
        %p219 = pneg %p88
        %p220 = pneg %p117
        %p221 = pneg %p114
        %s222 = sand.u32 %s104, 1
        %s223 = scalar_lea.sflag [#allocation4], %s222
        %s224 = sand.u32 %s104, 1
        %s225 = smul.addr %s224, 8
        %s226 = scalar_lea.vmem [#allocation7], %s225
        %v227 = vld [vmem:[%s188] sm:$0xff]
        %v228 = vld [vmem:[%s198] sm:$0xff]
        %v229 = vld [vmem:[%s2] sm:$0x1]
        %v230 = vand.u32 2147483647, %v227
        %v231 = vsub.f32 0.0, %v230
        %v232 = vmul.f32 %v231, 1.442695
        %v233 = vpow.pop %v232
        %v234 = vadd.f32 %v233, 1.0
        %v235 = vlog2.pop %v234
        %v236 = vmul.f32 %v235, 0.6931472
        %v237 = vmul.f32 -0.5, %v233
        %v238 = vadd.f32 %v237, 1.0
        %v239 = vmul.f32 %v238, %v233
        %v240 = vand.u32 2147483647, %v233
        %vm241 = vcmp.lt.f32.partialorder %v240, 0.0004427343
        %v242 = vsel %vm241, %v239, %v236
        %v243 = vsub.f32 0.0, %v227
        %v244 = vmax.f32 %v243, 0.0
        %v245 = vadd.f32 %v244, %v242
        %v246 = vmax.f32 %v227, 0.0
        %v247 = vadd.f32 %v246, %v242
        %v249 = vperm.slane %v229, 0
        %v251 = vmul.f32 %v228, %v249
        %v252 = vmul.f32 %v251, %v245
        %v253 = vsub.f32 1.0, %v228
        %v254 = vmul.f32 %v253, %v247
        %v255 = vadd.f32 %v252, %v254
        %v256 = vadd.f32 %v233, 1.0
        %v257 = vrcp.pop %v256
        %v258 = vmul.f32 %v256, %v257
        %v259 = vsub.f32 2.0, %v258
        %v260 = vmul.f32 %v257, %v259
        %vm261 = vcmp.ge.f32.partialorder %v227, 0.0
        %v262 = vsub.f32 1.0, %v260
        %v263 = vsel %vm261, %v260, %v262
        %v264 = vadd.f32 %v263, %v228
        %v265 = vmul.f32 %v263, %v228
        %v266 = vmul.f32 %v265, 2.0
        %v267 = vsub.f32 %v264, %v266
        %v268 = vmax.f32 %v267, 0.0
        %v269 = vmul.f32 %v268, %v268
        %v270 = vmul.f32 %v269, %v255
        %v271 = vadd.f32 %v270, 0.0
        %272 = vst [vmem:[%s226] sm:$0xff] %v271
        %s273 = sand.u32 %s104, 1
        %s274 = scalar_lea.sflag [#allocation4], %s273
        %s275 = sand.u32 %s104, 1
        %s276 = smul.addr %s275, 8
        %s277 = scalar_lea.vmem [#allocation7], %s276
        // Predicated region
        $region41: #{tpu_custom_call.1} parent=31 // pred_check
          %p278 = pneg %p114
        $region42: #{tpu_custom_call.1} parent=31 // pred_check_branch
          %280 = sbr.rel (%p278) target = $region44
        $region43: #{tpu_custom_call.1} parent=31 // pred_region
          %282 = vsyncadd %s274, 0
          %s283 = smul.addr %s23, 8
          %s284 = scalar_lea.hbm %s3, %s283
          %s286 = sshll.u32 %s277, 4
          %s287 = int_to_ptr.vmem [resolvable:$true] %s286
          %s288 = sshll.u32 %s284, 4
          %s289 = int_to_ptr.hbm [resolvable:$true] %s288
          %291 = dma.vmem_to_hbm [thread:$0]  %s287, 128, %s289, %s274
        $region44: #{tpu_custom_call.1} parent=31 // pred_fallthru
          _
      $region32: #{tpu_custom_call.1} parent=5 // pred_fallthru
        _
      %p292 = scmp.le.s32.totalorder 2, %s18
      // Predicated region
      $region45: #{tpu_custom_call.1} parent=5 // pred_check
        %p293 = pneg %p292
      $region46: #{tpu_custom_call.1} parent=5 // pred_check_branch
        %295 = sbr.rel (%p293) target = $region48
      $region47: #{tpu_custom_call.1} parent=5 // pred_region
        %s296 = ssub.s32 %s18, 2
        // Predicated region
        $region49: #{tpu_custom_call.1} parent=47 // pred_check
          %p297 = pneg %p120
        $region50: #{tpu_custom_call.1} parent=47 // pred_check_branch
          %299 = sbr.rel (%p297) target = $region52
        $region51: #{tpu_custom_call.1} parent=47 // pred_region
          %s300 = sand.u32 %s105, 1
          %s301 = scalar_lea.sflag [#allocation4], %s300
          %s302 = sand.u32 %s105, 1
          %s303 = smul.addr %s302, 8
          %s304 = scalar_lea.vmem [#allocation7], %s303
          %306 = dma.done %s301, 128
        $region52: #{tpu_custom_call.1} parent=47 // pred_fallthru
          _
      $region48: #{tpu_custom_call.1} parent=5 // pred_fallthru
        _
    $region6: #{tpu_custom_call.1} parent=1 // loop_footer
      %s22 = sadd.s32 1, %s18
    $region7: #{tpu_custom_call.1} parent=1 // loop_footer_branch
      %17 = sbr.rel target = $region3
    $region8: #{tpu_custom_call.1} parent=1 // loop_exit
      _
    %307 = vsyncpa [#allocation3], 1
    %s308 = scalar_lea.sflag [#allocation3], 1
    %309 = vsyncpa %s308, 1
    %310 = vsyncpa [#allocation6], 1
    %s311 = scalar_lea.sflag [#allocation6], 1
    %312 = vsyncpa %s311, 1
    %313 = vsyncpa [#allocation4], 1
    %s314 = scalar_lea.sflag [#allocation4], 1
    %315 = vsyncpa %s314, 1

</llo_original>
